<compile_context>
chip_gen: v5e
topology: v5e:2x2
jax: 0.10.0
libtpu: 0.0.40
codegen_flags: <defaults>
</compile_context>

<pallas_src>
import functools
import math
from typing import NamedTuple

import jax
import jax.numpy as jnp
from jax.experimental import pallas as pl
from jax.experimental.pallas import tpu as pltpu

LANE = 128
SUBLANE = 8
MAX_TK = 2048                      # K-tile for the first (flattened-input) matmul
COMPUTE_DTYPE = jnp.bfloat16       # MXU operand dtype (f32 accumulation)


def _round_up(n, m):
    return ((n + m - 1) // m) * m


class Dims(NamedTuple):
    d_in: int
    d_in_p: int
    tk: int
    f_bb: int
    f_bb_p: int
    feat_dim: int
    feat_p: int
    class_num: int
    cls_p: int


def _pad2(a, rows, cols):
    if a.shape == (rows, cols):
        return a
    return jnp.pad(a, ((0, rows - a.shape[0]), (0, cols - a.shape[1])))


def prepare_params(params):
    """One-time weight prep (hoisted out of the per-forward hot path):
    lane-dense zero padding, the [backbone_fc | proj_head[0]] fusion concat,
    and the bf16 cast of every matmul operand (biases stay f32)."""
    (wb1, bb1, wbc, bbc, wp1, bp1, wp2, bp2, wc, bc) = params
    d_in, f_bb = wb1.shape
    feat_dim = wp1.shape[1]
    class_num = wc.shape[1]

    d_in_p = _round_up(d_in, LANE)
    if d_in_p > MAX_TK:
        tk = MAX_TK
        d_in_p = _round_up(d_in_p, tk)       # K padded with zeros -> same result
    else:
        tk = d_in_p
    f_bb_p = _round_up(f_bb, LANE)
    feat_p = _round_up(feat_dim, LANE)
    cls_p = _round_up(class_num, LANE)

    wb1_p = _pad2(wb1, d_in_p, f_bb_p).astype(COMPUTE_DTYPE)
    bb1_p = _pad2(bb1, 1, f_bb_p).astype(jnp.float32)
    # fused weight for both consumers of `feat`: [backbone fc | proj_head[0]]
    wcat = jnp.concatenate([_pad2(wbc, f_bb_p, cls_p),
                            _pad2(wp1, f_bb_p, feat_p)], axis=1).astype(COMPUTE_DTYPE)
    bcat = jnp.concatenate([_pad2(bbc, 1, cls_p),
                            _pad2(bp1, 1, feat_p)], axis=1).astype(jnp.float32)
    wp2_p = _pad2(wp2, feat_p, feat_p).astype(COMPUTE_DTYPE)
    bp2_p = _pad2(bp2, 1, feat_p).astype(jnp.float32)
    wc_p = _pad2(wc, feat_p, cls_p).astype(COMPUTE_DTYPE)
    bc_p = _pad2(bc, 1, cls_p).astype(jnp.float32)

    weights = (wb1_p, bb1_p, wcat, bcat, wp2_p, bp2_p, wc_p, bc_p)
    dims = Dims(d_in, d_in_p, tk, f_bb, f_bb_p, feat_dim, feat_p, class_num, cls_p)
    return weights, dims


def _head_kernel(x_ref,                 # (TB, TK)          bf16 flattened-input K-slab
                 wb1_ref, bb1_ref,      # (TK, Fbb_p) bf16, (1, Fbb_p) f32
                 wcat_ref, bcat_ref,    # (Fbb_p, Cp+Fp) bf16, (1, Cp+Fp) f32
                 wp2_ref, bp2_ref,      # (Fp, Fp) bf16,    (1, Fp) f32
                 wc_ref, bc_ref,        # (Fp, Cp) bf16,    (1, Cp) f32
                 feat_ref, out_ref, proj_ref, logit_ref,
                 acc_ref,               # (TB, Fbb_p) f32 scratch accumulator
                 *, cls_pad):
    k = pl.program_id(1)

    @pl.when(k == 0)
    def _():
        acc_ref[...] = jnp.zeros_like(acc_ref)

    # --- synthetic backbone body, K-tiled: acc += x_k @ Wb1_k (bf16 MXU, f32 acc) ---
    acc_ref[...] += jnp.dot(x_ref[...], wb1_ref[...],
                            preferred_element_type=jnp.float32)

    @pl.when(k == pl.num_programs(1) - 1)
    def _():
        feat = jnp.maximum(acc_ref[...] + bb1_ref[...], 0.0)          # feats[-1]
        feat_ref[...] = feat

        # fused matmul for both consumers of `feat`: [backbone fc | proj_head[0]]
        comb = jnp.dot(feat.astype(wcat_ref.dtype), wcat_ref[...],
                       preferred_element_type=jnp.float32) + bcat_ref[...]
        out_ref[...] = comb[:, :cls_pad]              # backbone logits (lane-aligned)
        h = jnp.maximum(comb[:, cls_pad:], 0.0)       # proj_head ReLU

        # proj_head[2]
        h = jnp.dot(h.astype(wp2_ref.dtype), wp2_ref[...],
                    preferred_element_type=jnp.float32) + bp2_ref[...]

        # Normalize(power=2) then *16: x * (rsqrt(sum(x^2)) * 16)  -- no eps, like PyTorch
        inv = jax.lax.rsqrt(jnp.sum(h * h, axis=1, keepdims=True)) * 16.0
        proj = h * inv
        proj_ref[...] = proj

        # classifier
        logit_ref[...] = jnp.dot(proj.astype(wc_ref.dtype), wc_ref[...],
                                 preferred_element_type=jnp.float32) + bc_ref[...]


def _choose_batch_tile(B, tb_max):
    """Sublane-aligned batch tile: aim for >=2 grid steps (v7x dual-TC sharding via
    the 'parallel' axis) while keeping batch-padding waste to <= one sublane group."""
    n_steps = max(2, pl.cdiv(B, tb_max))
    tile = _round_up(min(pl.cdiv(B, n_steps), tb_max), SUBLANE)
    return max(SUBLANE, min(tile, _round_up(B, SUBLANE)))


def wrapper_forward(x, weights, dims, *, tb=256):
    """Mirrors wrapper.forward(x): returns (feat, out, proj_x, proj_logit, feats)."""
    (wb1_p, bb1_p, wcat, bcat, wp2_p, bp2_p, wc_p, bc_p) = weights
    B = x.shape[0]
    x_flat = x.reshape(B, -1)                     # glue: flatten NCHW
    assert x_flat.shape[1] == dims.d_in, "input feature size mismatch"

    TB = _choose_batch_tile(B, tb)
    B_p = _round_up(B, TB)

    x_flat = x_flat.astype(COMPUTE_DTYPE)
    if x_flat.shape != (B_p, dims.d_in_p):        # skip the pad when already aligned
        x_flat = jnp.pad(x_flat, ((0, B_p - B), (0, dims.d_in_p - dims.d_in)))

    grid = (B_p // TB, dims.d_in_p // dims.tk)

    x_spec = pl.BlockSpec((TB, dims.tk), lambda i, k: (i, k))
    wb1_spec = pl.BlockSpec((dims.tk, dims.f_bb_p), lambda i, k: (k, 0))
    resident = lambda a: pl.BlockSpec(a.shape, lambda i, k: (0, 0))  # VMEM-resident

    in_specs = [x_spec, wb1_spec] + [resident(a) for a in
                (bb1_p, wcat, bcat, wp2_p, bp2_p, wc_p, bc_p)]

    out_shapes = (
        jax.ShapeDtypeStruct((B_p, dims.f_bb_p), jnp.float32),   # feat
        jax.ShapeDtypeStruct((B_p, dims.cls_p), jnp.float32),    # out (backbone logits)
        jax.ShapeDtypeStruct((B_p, dims.feat_p), jnp.float32),   # proj_x
        jax.ShapeDtypeStruct((B_p, dims.cls_p), jnp.float32),    # proj_logit
    )
    out_specs = (
        pl.BlockSpec((TB, dims.f_bb_p), lambda i, k: (i, 0)),
        pl.BlockSpec((TB, dims.cls_p), lambda i, k: (i, 0)),
        pl.BlockSpec((TB, dims.feat_p), lambda i, k: (i, 0)),
        pl.BlockSpec((TB, dims.cls_p), lambda i, k: (i, 0)),
    )

    # explicit VMEM budget: double-buffered tiles + resident weights + scratch
    bf16 = 2
    vmem_need = (
        2 * TB * dims.tk * bf16                                        # x K-slab
        + 2 * dims.tk * dims.f_bb_p * bf16                             # wb1 K-slab
        + 2 * (dims.f_bb_p * (dims.cls_p + dims.feat_p)
               + dims.feat_p * dims.feat_p
               + dims.feat_p * dims.cls_p) * bf16                      # resident weights
        + 2 * 4 * (dims.f_bb_p + 2 * (dims.cls_p + dims.feat_p))       # biases (f32)
        + 2 * TB * (dims.f_bb_p + 2 * dims.cls_p + dims.feat_p) * 4    # outputs (f32)
        + TB * dims.f_bb_p * 4                                         # accumulator
    )
    vmem_limit = int(min(64 * 1024 * 1024,                             # <= v7x physical
                         max(vmem_need * 2 + (1 << 20), 16 << 20)))

    flops = 2 * B_p * (dims.d_in_p * dims.f_bb_p
                       + dims.f_bb_p * (dims.cls_p + dims.feat_p)
                       + dims.feat_p * dims.feat_p
                       + dims.feat_p * dims.cls_p)
    bytes_accessed = (int(x_flat.size) * bf16
                      + sum(int(a.size) * a.dtype.itemsize for a in weights)
                      + 4 * sum(math.prod(s.shape) for s in out_shapes))

    feat, out, proj_x, proj_logit = pl.pallas_call(
        functools.partial(_head_kernel, cls_pad=dims.cls_p),
        grid=grid,
        in_specs=in_specs,
        out_specs=out_specs,
        out_shape=out_shapes,
        scratch_shapes=[pltpu.VMEM((TB, dims.f_bb_p), jnp.float32)],
        compiler_params=pltpu.CompilerParams(
            dimension_semantics=("parallel", "arbitrary"),
            vmem_limit_bytes=vmem_limit),
        cost_estimate=pl.CostEstimate(flops=flops,
                                      transcendentals=B_p,
                                      bytes_accessed=bytes_accessed),
    )(x_flat, wb1_p, bb1_p, wcat, bcat, wp2_p, bp2_p, wc_p, bc_p)

    feat = feat[:B, :dims.f_bb]
    out = out[:B, :dims.class_num]
    proj_x = proj_x[:B, :dims.feat_dim]
    proj_logit = proj_logit[:B, :dims.class_num]
    feats = [feat]   # TODO(synk): synthetic backbone exposes only its penultimate feature
    return feat, out, proj_x, proj_logit, feats


def make_params(key, d_in, f_bb, feat_dim, class_num):
    """PyTorch Linear weights are (out, in); stored pre-transposed as (in, out)."""
    ks = jax.random.split(key, 10)

    def lin(kw, kb, fan_in, fan_out):
        bound = 1.0 / jnp.sqrt(fan_in)
        w = jax.random.uniform(kw, (fan_in, fan_out), jnp.float32, -bound, bound)
        b = jax.random.uniform(kb, (1, fan_out), jnp.float32, -bound, bound)
        return w, b

    wb1, bb1 = lin(ks[0], ks[1], d_in, f_bb)           # backbone body
    wbc, bbc = lin(ks[2], ks[3], f_bb, class_num)      # backbone fc (last child)
    wp1, bp1 = lin(ks[4], ks[5], f_bb, feat_dim)       # proj_head Linear 1
    wp2, bp2 = lin(ks[6], ks[7], feat_dim, feat_dim)   # proj_head Linear 2
    wc, bc = lin(ks[8], ks[9], feat_dim, class_num)    # classifier
    return (wb1, bb1, wbc, bbc, wp1, bp1, wp2, bp2, wc, bc)


def _reference(x, params):
    (wb1, bb1, wbc, bbc, wp1, bp1, wp2, bp2, wc, bc) = params
    xf = x.reshape(x.shape[0], -1)
    feat = jnp.maximum(xf @ wb1 + bb1, 0.0)
    out = feat @ wbc + bbc
    h = jnp.maximum(feat @ wp1 + bp1, 0.0) @ wp2 + bp2
    proj = h / jnp.sqrt(jnp.sum(h * h, axis=1, keepdims=True)) * 16.0
    logit = proj @ wc + bc
    return feat, out, proj, logit


if __name__ == "__main__":
    B, C, H, W = 2, 4, 16, 16        # x: NCHW
    d_in = C * H * W                 # 1024
    f_bb = 128                       # backbone penultimate feature dim (in_features)
    feat_dim = 32
    class_num = 10

    key = jax.random.PRNGKey(0)
    kx, kp = jax.random.split(key)
    x = jax.random.normal(kx, (B, C, H, W), jnp.float32)
    params = make_params(kp, d_in, f_bb, feat_dim, class_num)

    weights, dims = prepare_params(params)                     # one-time prep (hoisted)
    fwd = jax.jit(functools.partial(wrapper_forward, dims=dims, tb=256))

    feat, out, proj_x, proj_logit, feats = fwd(x, weights)
    jax.block_until_ready((feat, out, proj_x, proj_logit))

    # correctness vs. pure-f32 JAX reference; kernel matmul operands are bf16
    # (f32 accumulation), so tolerances reflect bf16 rounding of inputs/weights.
    rf, ro, rp, rl = _reference(x, params)
    assert jnp.allclose(feat, rf, atol=5e-2, rtol=5e-2)
    assert jnp.allclose(out, ro, atol=5e-2, rtol=5e-2)
    assert jnp.allclose(proj_x, rp, atol=5e-2, rtol=5e-2)
    assert jnp.allclose(proj_logit, rl, atol=5e-2, rtol=5e-2)

    print("KERNEL_OK")
</pallas_src>

<mosaic_0001>
module attributes {stable_mosaic.version = 11 : i64} {
  func.func @_head_kernel(%arg0: i32, %arg1: i32, %arg2: memref<8x1024xbf16, #tpu.memory_space<vmem>>, %arg3: memref<1024x128xbf16, #tpu.memory_space<vmem>>, %arg4: memref<1x128xf32, #tpu.memory_space<vmem>>, %arg5: memref<128x256xbf16, #tpu.memory_space<vmem>>, %arg6: memref<1x256xf32, #tpu.memory_space<vmem>>, %arg7: memref<128x128xbf16, #tpu.memory_space<vmem>>, %arg8: memref<1x128xf32, #tpu.memory_space<vmem>>, %arg9: memref<128x128xbf16, #tpu.memory_space<vmem>>, %arg10: memref<1x128xf32, #tpu.memory_space<vmem>>, %arg11: memref<8x128xf32, #tpu.memory_space<vmem>>, %arg12: memref<8x128xf32, #tpu.memory_space<vmem>>, %arg13: memref<8x128xf32, #tpu.memory_space<vmem>>, %arg14: memref<8x128xf32, #tpu.memory_space<vmem>>, %arg15: memref<8x128xf32, #tpu.memory_space<vmem>>) attributes {dimension_semantics = [#tpu.dimension_semantics<parallel>, #tpu.dimension_semantics<arbitrary>], iteration_bounds = array<i64: 1, 1>, scalar_prefetch = 0 : i64, scratch_operands = 1 : i64, tpu.core_type = #tpu.core_type<tc>, window_params = [{transform_indices = @transform_0, window_bounds = array<i64: 8, 1024>}, {transform_indices = @transform_1, window_bounds = array<i64: 1024, 128>}, {pipeline_mode = #tpu.pipeline_mode<synchronous>, transform_indices = @transform_2, window_bounds = array<i64: 1, 128>}, {pipeline_mode = #tpu.pipeline_mode<synchronous>, transform_indices = @transform_3, window_bounds = array<i64: 128, 256>}, {pipeline_mode = #tpu.pipeline_mode<synchronous>, transform_indices = @transform_4, window_bounds = array<i64: 1, 256>}, {pipeline_mode = #tpu.pipeline_mode<synchronous>, transform_indices = @transform_5, window_bounds = array<i64: 128, 128>}, {pipeline_mode = #tpu.pipeline_mode<synchronous>, transform_indices = @transform_6, window_bounds = array<i64: 1, 128>}, {pipeline_mode = #tpu.pipeline_mode<synchronous>, transform_indices = @transform_7, window_bounds = array<i64: 128, 128>}, {pipeline_mode = #tpu.pipeline_mode<synchronous>, transform_indices = @transform_8, window_bounds = array<i64: 1, 128>}, {transform_indices = @transform_9, window_bounds = array<i64: 8, 128>}, {transform_indices = @transform_10, window_bounds = array<i64: 8, 128>}, {transform_indices = @transform_11, window_bounds = array<i64: 8, 128>}, {transform_indices = @transform_12, window_bounds = array<i64: 8, 128>}]} {
    %c0_i32 = arith.constant 0 : i32
    %0 = arith.cmpi eq, %arg1, %c0_i32 : i32
    %1 = arith.extui %0 : i1 to i32
    %c0_i32_0 = arith.constant 0 : i32
    %2 = arith.cmpi ne, %1, %c0_i32_0 : i32
    scf.if %2 {
      %cst_10 = arith.constant 0.000000e+00 : f32
      %12 = vector.broadcast %cst_10 : f32 to vector<8x128xf32>
      %c0_11 = arith.constant 0 : index
      %c0_12 = arith.constant 0 : index
      %13 = vector.load %arg15[%c0_11, %c0_12] : memref<8x128xf32, #tpu.memory_space<vmem>>, vector<8x128xf32>
      tpu.vector_store %arg15[%c0_11, %c0_12], %12 {strides = array<i32>} : memref<8x128xf32, #tpu.memory_space<vmem>>, vector<8x128xf32>,
    } else {
    }
    %c0 = arith.constant 0 : index
    %c0_1 = arith.constant 0 : index
    %3 = vector.load %arg15[%c0, %c0_1] : memref<8x128xf32, #tpu.memory_space<vmem>>, vector<8x128xf32>
    %c0_2 = arith.constant 0 : index
    %c0_3 = arith.constant 0 : index
    %4 = vector.load %arg2[%c0_2, %c0_3] : memref<8x1024xbf16, #tpu.memory_space<vmem>>, vector<8x1024xbf16>
    %c0_4 = arith.constant 0 : index
    %c0_5 = arith.constant 0 : index
    %5 = vector.load %arg3[%c0_4, %c0_5] : memref<1024x128xbf16, #tpu.memory_space<vmem>>, vector<1024x128xbf16>
    %cst = arith.constant dense<0.000000e+00> : vector<8x128xf32>
    %6 = tpu.matmul %4, %5, %cst {dimension_numbers = #tpu.dot_dimension_numbers<[1], [0], [0], [1], [0, 0, 1, 1], [], []>} : vector<8x1024xbf16>, vector<1024x128xbf16>, vector<8x128xf32> -> vector<8x128xf32>
    %7 = arith.addf %3, %6 : vector<8x128xf32>
    %c0_6 = arith.constant 0 : index
    %c0_7 = arith.constant 0 : index
    %8 = vector.load %arg15[%c0_6, %c0_7] : memref<8x128xf32, #tpu.memory_space<vmem>>, vector<8x128xf32>
    tpu.vector_store %arg15[%c0_6, %c0_7], %7 {strides = array<i32>} : memref<8x128xf32, #tpu.memory_space<vmem>>, vector<8x128xf32>,
    %c0_i32_8 = arith.constant 0 : i32
    %9 = arith.cmpi eq, %arg1, %c0_i32_8 : i32
    %10 = arith.extui %9 : i1 to i32
    %c0_i32_9 = arith.constant 0 : i32
    %11 = arith.cmpi ne, %10, %c0_i32_9 : i32
    scf.if %11 {
      %c0_10 = arith.constant 0 : index
      %c0_11 = arith.constant 0 : index
      %12 = vector.load %arg15[%c0_10, %c0_11] : memref<8x128xf32, #tpu.memory_space<vmem>>, vector<8x128xf32>
      %c0_12 = arith.constant 0 : index
      %c0_13 = arith.constant 0 : index
      %13 = vector.load %arg4[%c0_12, %c0_13] : memref<1x128xf32, #tpu.memory_space<vmem>>, vector<1x128xf32>
      %14 = vector.broadcast %13 : vector<1x128xf32> to vector<8x128xf32>
      %15 = arith.addf %12, %14 : vector<8x128xf32>
      %cst_14 = arith.constant 0.000000e+00 : f32
      %16 = vector.broadcast %cst_14 : f32 to vector<8x128xf32>
      %17 = arith.maximumf %15, %16 : vector<8x128xf32>
      %c0_15 = arith.constant 0 : index
      %c0_16 = arith.constant 0 : index
      %18 = vector.load %arg11[%c0_15, %c0_16] : memref<8x128xf32, #tpu.memory_space<vmem>>, vector<8x128xf32>
      tpu.vector_store %arg11[%c0_15, %c0_16], %17 {strides = array<i32>} : memref<8x128xf32, #tpu.memory_space<vmem>>, vector<8x128xf32>,
      %19 = arith.truncf %17 : vector<8x128xf32> to vector<8x128xbf16>
      %c0_17 = arith.constant 0 : index
      %c0_18 = arith.constant 0 : index
      %20 = vector.load %arg5[%c0_17, %c0_18] : memref<128x256xbf16, #tpu.memory_space<vmem>>, vector<128x256xbf16>
      %cst_19 = arith.constant dense<0.000000e+00> : vector<8x256xf32>
      %21 = tpu.matmul %19, %20, %cst_19 {dimension_numbers = #tpu.dot_dimension_numbers<[1], [0], [0], [1], [0, 0, 1, 1], [], []>} : vector<8x128xbf16>, vector<128x256xbf16>, vector<8x256xf32> -> vector<8x256xf32>
      %c0_20 = arith.constant 0 : index
      %c0_21 = arith.constant 0 : index
      %22 = vector.load %arg6[%c0_20, %c0_21] : memref<1x256xf32, #tpu.memory_space<vmem>>, vector<1x256xf32>
      %23 = vector.broadcast %22 : vector<1x256xf32> to vector<8x256xf32>
      %24 = arith.addf %21, %23 : vector<8x256xf32>
      %25 = vector.extract_strided_slice %24 {offsets = [0, 0], sizes = [8, 128], strides = [1, 1]} : vector<8x256xf32> to vector<8x128xf32>
      %c0_22 = arith.constant 0 : index
      %c0_23 = arith.constant 0 : index
      %26 = vector.load %arg12[%c0_22, %c0_23] : memref<8x128xf32, #tpu.memory_space<vmem>>, vector<8x128xf32>
      tpu.vector_store %arg12[%c0_22, %c0_23], %25 {strides = array<i32>} : memref<8x128xf32, #tpu.memory_space<vmem>>, vector<8x128xf32>,
      %27 = vector.extract_strided_slice %24 {offsets = [0, 128], sizes = [8, 128], strides = [1, 1]} : vector<8x256xf32> to vector<8x128xf32>
      %cst_24 = arith.constant 0.000000e+00 : f32
      %28 = vector.broadcast %cst_24 : f32 to vector<8x128xf32>
      %29 = arith.maximumf %27, %28 : vector<8x128xf32>
      %30 = arith.truncf %29 : vector<8x128xf32> to vector<8x128xbf16>
      %c0_25 = arith.constant 0 : index
      %c0_26 = arith.constant 0 : index
      %31 = vector.load %arg7[%c0_25, %c0_26] : memref<128x128xbf16, #tpu.memory_space<vmem>>, vector<128x128xbf16>
      %cst_27 = arith.constant dense<0.000000e+00> : vector<8x128xf32>
      %32 = tpu.matmul %30, %31, %cst_27 {dimension_numbers = #tpu.dot_dimension_numbers<[1], [0], [0], [1], [0, 0, 1, 1], [], []>} : vector<8x128xbf16>, vector<128x128xbf16>, vector<8x128xf32> -> vector<8x128xf32>
      %c0_28 = arith.constant 0 : index
      %c0_29 = arith.constant 0 : index
      %33 = vector.load %arg8[%c0_28, %c0_29] : memref<1x128xf32, #tpu.memory_space<vmem>>, vector<1x128xf32>
      %34 = vector.broadcast %33 : vector<1x128xf32> to vector<8x128xf32>
      %35 = arith.addf %32, %34 : vector<8x128xf32>
      %36 = arith.mulf %35, %35 : vector<8x128xf32>
      %cst_30 = arith.constant dense<0.000000e+00> : vector<8xf32>
      %37 = vector.multi_reduction <add>, %36, %cst_30 [1] : vector<8x128xf32> to vector<8xf32>
      %38 = vector.shape_cast %37 : vector<8xf32> to vector<8x1xf32>
      %39 = math.rsqrt %38 : vector<8x1xf32>
      %cst_31 = arith.constant 1.600000e+01 : f32
      %40 = vector.broadcast %cst_31 : f32 to vector<8x1xf32>
      %41 = arith.mulf %39, %40 : vector<8x1xf32>
      %42 = vector.broadcast %41 : vector<8x1xf32> to vector<8x128xf32>
      %43 = arith.mulf %35, %42 : vector<8x128xf32>
      %c0_32 = arith.constant 0 : index
      %c0_33 = arith.constant 0 : index
      %44 = vector.load %arg13[%c0_32, %c0_33] : memref<8x128xf32, #tpu.memory_space<vmem>>, vector<8x128xf32>
      tpu.vector_store %arg13[%c0_32, %c0_33], %43 {strides = array<i32>} : memref<8x128xf32, #tpu.memory_space<vmem>>, vector<8x128xf32>,
      %45 = arith.truncf %43 : vector<8x128xf32> to vector<8x128xbf16>
      %c0_34 = arith.constant 0 : index
      %c0_35 = arith.constant 0 : index
      %46 = vector.load %arg9[%c0_34, %c0_35] : memref<128x128xbf16, #tpu.memory_space<vmem>>, vector<128x128xbf16>
      %cst_36 = arith.constant dense<0.000000e+00> : vector<8x128xf32>
      %47 = tpu.matmul %45, %46, %cst_36 {dimension_numbers = #tpu.dot_dimension_numbers<[1], [0], [0], [1], [0, 0, 1, 1], [], []>} : vector<8x128xbf16>, vector<128x128xbf16>, vector<8x128xf32> -> vector<8x128xf32>
      %c0_37 = arith.constant 0 : index
      %c0_38 = arith.constant 0 : index
      %48 = vector.load %arg10[%c0_37, %c0_38] : memref<1x128xf32, #tpu.memory_space<vmem>>, vector<1x128xf32>
      %49 = vector.broadcast %48 : vector<1x128xf32> to vector<8x128xf32>
      %50 = arith.addf %47, %49 : vector<8x128xf32>
      %c0_39 = arith.constant 0 : index
      %c0_40 = arith.constant 0 : index
      %51 = vector.load %arg14[%c0_39, %c0_40] : memref<8x128xf32, #tpu.memory_space<vmem>>, vector<8x128xf32>
      tpu.vector_store %arg14[%c0_39, %c0_40], %50 {strides = array<i32>} : memref<8x128xf32, #tpu.memory_space<vmem>>, vector<8x128xf32>,
    } else {
    }
    return
  }
  func.func @transform_0(%arg0: i32, %arg1: i32) -> (i32, i32) {
    %c0_i32 = arith.constant 0 : i32
    return %arg0, %arg1 : i32, i32
  }
  func.func @transform_1(%arg0: i32, %arg1: i32) -> (i32, i32) {
    %c0_i32 = arith.constant 0 : i32
    %c0_i32_0 = arith.constant 0 : i32
    return %arg1, %c0_i32 : i32, i32
  }
  func.func @transform_2(%arg0: i32, %arg1: i32) -> (i32, i32) {
    %c0_i32 = arith.constant 0 : i32
    %c0_i32_0 = arith.constant 0 : i32
    %c0_i32_1 = arith.constant 0 : i32
    return %c0_i32, %c0_i32_0 : i32, i32
  }
  func.func @transform_3(%arg0: i32, %arg1: i32) -> (i32, i32) {
    %c0_i32 = arith.constant 0 : i32
    %c0_i32_0 = arith.constant 0 : i32
    %c0_i32_1 = arith.constant 0 : i32
    return %c0_i32, %c0_i32_0 : i32, i32
  }
  func.func @transform_4(%arg0: i32, %arg1: i32) -> (i32, i32) {
    %c0_i32 = arith.constant 0 : i32
    %c0_i32_0 = arith.constant 0 : i32
    %c0_i32_1 = arith.constant 0 : i32
    return %c0_i32, %c0_i32_0 : i32, i32
  }
  func.func @transform_5(%arg0: i32, %arg1: i32) -> (i32, i32) {
    %c0_i32 = arith.constant 0 : i32
    %c0_i32_0 = arith.constant 0 : i32
    %c0_i32_1 = arith.constant 0 : i32
    return %c0_i32, %c0_i32_0 : i32, i32
  }
  func.func @transform_6(%arg0: i32, %arg1: i32) -> (i32, i32) {
    %c0_i32 = arith.constant 0 : i32
    %c0_i32_0 = arith.constant 0 : i32
    %c0_i32_1 = arith.constant 0 : i32
    return %c0_i32, %c0_i32_0 : i32, i32
  }
  func.func @transform_7(%arg0: i32, %arg1: i32) -> (i32, i32) {
    %c0_i32 = arith.constant 0 : i32
    %c0_i32_0 = arith.constant 0 : i32
    %c0_i32_1 = arith.constant 0 : i32
    return %c0_i32, %c0_i32_0 : i32, i32
  }
  func.func @transform_8(%arg0: i32, %arg1: i32) -> (i32, i32) {
    %c0_i32 = arith.constant 0 : i32
    %c0_i32_0 = arith.constant 0 : i32
    %c0_i32_1 = arith.constant 0 : i32
    return %c0_i32, %c0_i32_0 : i32, i32
  }
  func.func @transform_9(%arg0: i32, %arg1: i32) -> (i32, i32) {
    %c0_i32 = arith.constant 0 : i32
    %c0_i32_0 = arith.constant 0 : i32
    return %arg0, %c0_i32 : i32, i32
  }
  func.func @transform_10(%arg0: i32, %arg1: i32) -> (i32, i32) {
    %c0_i32 = arith.constant 0 : i32
    %c0_i32_0 = arith.constant 0 : i32
    return %arg0, %c0_i32 : i32, i32
  }
  func.func @transform_11(%arg0: i32, %arg1: i32) -> (i32, i32) {
    %c0_i32 = arith.constant 0 : i32
    %c0_i32_0 = arith.constant 0 : i32
    return %arg0, %c0_i32 : i32, i32
  }
  func.func @transform_12(%arg0: i32, %arg1: i32) -> (i32, i32) {
    %c0_i32 = arith.constant 0 : i32
    %c0_i32_0 = arith.constant 0 : i32
    return %arg0, %c0_i32 : i32, i32
  }
}

</mosaic_0001>

<llo_original>
// kernel: wrapper_forward.1
$region0: #{wrapper_forward.1}
  #allocation0 [shape = 'u32[]', space=smem, size = 0x4, offset = 0x4, fixed_abs, tag = 'smem constant byte address 0x4 - core index']
  #allocation1 [shape = 'u32[72,128]{1,0:T(1,128)}', space=vmem, size = 0x9000, scoped, tag = 'internal scratch']
  #allocation2 [shape = 'f32[8,128]{1,0:T(8,128)}', space=vmem, size = 0x1000, scoped, tag = 'scratch operand']
  %s0 = inlined_call_operand.vmem [shape: bf16[8,1024], index: 0, kind: input, shape index: {}]
  %s1 = inlined_call_operand.hbm [shape: bf16[1024,128], index: 1, kind: input, shape index: {}]
  %s2 = inlined_call_operand.vmem [shape: f32[1,128], index: 2, kind: input, shape index: {}]
  %s3 = inlined_call_operand.vmem [shape: bf16[128,256], index: 3, kind: input, shape index: {}]
  %s4 = inlined_call_operand.vmem [shape: f32[1,256], index: 4, kind: input, shape index: {}]
  %s5 = inlined_call_operand.vmem [shape: bf16[128,128], index: 5, kind: input, shape index: {}]
  %s6 = inlined_call_operand.vmem [shape: f32[1,128], index: 6, kind: input, shape index: {}]
  %s7 = inlined_call_operand.vmem [shape: bf16[128,128], index: 7, kind: input, shape index: {}]
  %s8 = inlined_call_operand.vmem [shape: f32[1,128], index: 8, kind: input, shape index: {}]
  %s9 = inlined_call_operand.vmem [shape: f32[8,128], index: 9, kind: output, shape index: {0}]
  %s10 = inlined_call_operand.vmem [shape: f32[8,128], index: 10, kind: output, shape index: {1}]
  %s11 = inlined_call_operand.vmem [shape: f32[8,128], index: 11, kind: output, shape index: {2}]
  %s12 = inlined_call_operand.vmem [shape: f32[8,128], index: 12, kind: output, shape index: {3}]
  %13 = xla_tuple %s9, %s10, %s11, %s12
  %s14 = sld [smem:[#allocation0]]
  $region82: #{wrapper_forward.1} parent=0
    _
  %s16 = ssub.s32 1, %s14
  %s17 = scalar_select 0, %s16, %s14
  $region1: #{wrapper_forward.1} parent=0
    #allocation3 [shape = 'u8[262144]{0}', space=vmem, size = 0x40000, scoped, tag = 'input window, operand 1, single buffered']
    #allocation4 [shape = 's32[1]{0}', space=sflag, size = 0x4, scoped, tag = 'scoped memory for wrapper_forward.1']
    %18 = vsyncpa [#allocation4], 0
    // Predicated region
    $region2: #{wrapper_forward.1} parent=1 // pred_check
      _
    $region3: #{wrapper_forward.1} parent=1 // pred_check_branch
      %20 = sbr.rel (0) target = $region5
    $region4: #{wrapper_forward.1} parent=1 // pred_region
      _
    $region5: #{wrapper_forward.1} parent=1 // pred_fallthru
      _
    // Predicated region
    $region6: #{wrapper_forward.1} parent=1 // pred_check
      _
    $region7: #{wrapper_forward.1} parent=1 // pred_check_branch
      %22 = sbr.rel (0) target = $region9
    $region8: #{wrapper_forward.1} parent=1 // pred_region
      %24 = vsyncadd [#allocation4], 0
      %s25 = sshll.u32 %s1, 4
      %s26 = int_to_ptr.hbm [resolvable:$true] %s25
      %s27 = sshll.u32 [#allocation3], 4
      %s28 = int_to_ptr.vmem [resolvable:$true] %s27
      %33 = dma.hbm_to_vmem [thread:$0]  %s26, 8192, %s28, [#allocation4], 64, 64, 4
    $region9: #{wrapper_forward.1} parent=1 // pred_fallthru
      _
    // Predicated region
    $region10: #{wrapper_forward.1} parent=1 // pred_check
      _
    $region11: #{wrapper_forward.1} parent=1 // pred_check_branch
      %35 = sbr.rel (0) target = $region13
    $region12: #{wrapper_forward.1} parent=1 // pred_region
      _
    $region13: #{wrapper_forward.1} parent=1 // pred_fallthru
      _
    // Predicated region
    $region14: #{wrapper_forward.1} parent=1 // pred_check
      _
    $region15: #{wrapper_forward.1} parent=1 // pred_check_branch
      %37 = sbr.rel (0) target = $region17
    $region16: #{wrapper_forward.1} parent=1 // pred_region
      _
    $region17: #{wrapper_forward.1} parent=1 // pred_fallthru
      _
    // Predicated region
    $region18: #{wrapper_forward.1} parent=1 // pred_check
      _
    $region19: #{wrapper_forward.1} parent=1 // pred_check_branch
      %39 = sbr.rel (0) target = $region21
    $region20: #{wrapper_forward.1} parent=1 // pred_region
      _
    $region21: #{wrapper_forward.1} parent=1 // pred_fallthru
      _
    // Predicated region
    $region22: #{wrapper_forward.1} parent=1 // pred_check
      _
    $region23: #{wrapper_forward.1} parent=1 // pred_check_branch
      %41 = sbr.rel (0) target = $region25
    $region24: #{wrapper_forward.1} parent=1 // pred_region
      _
    $region25: #{wrapper_forward.1} parent=1 // pred_fallthru
      _
    // Predicated region
    $region26: #{wrapper_forward.1} parent=1 // pred_check
      _
    $region27: #{wrapper_forward.1} parent=1 // pred_check_branch
      %43 = sbr.rel (0) target = $region29
    $region28: #{wrapper_forward.1} parent=1 // pred_region
      _
    $region29: #{wrapper_forward.1} parent=1 // pred_fallthru
      _
    // Predicated region
    $region30: #{wrapper_forward.1} parent=1 // pred_check
      _
    $region31: #{wrapper_forward.1} parent=1 // pred_check_branch
      %45 = sbr.rel (0) target = $region33
    $region32: #{wrapper_forward.1} parent=1 // pred_region
      _
    $region33: #{wrapper_forward.1} parent=1 // pred_fallthru
      _
    // Predicated region
    $region34: #{wrapper_forward.1} parent=1 // pred_check
      _
    $region35: #{wrapper_forward.1} parent=1 // pred_check_branch
      %47 = sbr.rel (0) target = $region37
    $region36: #{wrapper_forward.1} parent=1 // pred_region
      _
    $region37: #{wrapper_forward.1} parent=1 // pred_fallthru
      _
    // Predicated region
    $region38: #{wrapper_forward.1} parent=1 // pred_check
      _
    $region39: #{wrapper_forward.1} parent=1 // pred_check_branch
      %49 = sbr.rel (0) target = $region41
    $region40: #{wrapper_forward.1} parent=1 // pred_region
      %51 = dma.done [#allocation4], 8192
    $region41: #{wrapper_forward.1} parent=1 // pred_fallthru
      _
    %p52 = scmp.eq.s32.totalorder 0, 0
    // Predicated region
    $region42: #{wrapper_forward.1} parent=1 // pred_check
      %p53 = pneg %p52
    $region43: #{wrapper_forward.1} parent=1 // pred_check_branch
      %55 = sbr.rel (%p53) target = $region45
    $region44: #{wrapper_forward.1} parent=1 // pred_region
      %56 = vst [vmem:[#allocation2] sm:$0xff] 0.0
    $region45: #{wrapper_forward.1} parent=1 // pred_fallthru
      _
    %v57 = vld [vmem:[#allocation2] sm:$0xff]
    %v58 = vld [vmem:[%s0] sm:$0xff]
    %v59 = vld [vmem:[%s0 + $0x8] sm:$0xff]
    %v60 = vld [vmem:[%s0 + $0x10] sm:$0xff]
    %v61 = vld [vmem:[%s0 + $0x18] sm:$0xff]
    %v62 = vld [vmem:[#allocation3] sm:$0xf]
    %v63 = vld [vmem:[#allocation3 + $0x4] sm:$0xf]
    %v64 = vld [vmem:[#allocation3 + $0x8] sm:$0xf]
    %v65 = vld [vmem:[#allocation3 + $0xc] sm:$0xf]
    %v66 = vld [vmem:[#allocation3 + $0x10] sm:$0xf]
    %v67 = vld [vmem:[#allocation3 + $0x14] sm:$0xf]
    %v68 = vld [vmem:[#allocation3 + $0x18] sm:$0xf]
    %v69 = vld [vmem:[#allocation3 + $0x1c] sm:$0xf]
    %v70 = vld [vmem:[#allocation3 + $0x20] sm:$0xf]
    %v71 = vld [vmem:[#allocation3 + $0x24] sm:$0xf]
    %v72 = vld [vmem:[#allocation3 + $0x28] sm:$0xf]
    %v73 = vld [vmem:[#allocation3 + $0x2c] sm:$0xf]
    %v74 = vld [vmem:[#allocation3 + $0x30] sm:$0xf]
    %v75 = vld [vmem:[#allocation3 + $0x34] sm:$0xf]
    %v76 = vld [vmem:[#allocation3 + $0x38] sm:$0xf]
    %v77 = vld [vmem:[#allocation3 + $0x3c] sm:$0xf]
    %v78 = vld [vmem:[#allocation3 + $0x40] sm:$0xf]
    %v79 = vld [vmem:[#allocation3 + $0x44] sm:$0xf]
    %v80 = vld [vmem:[#allocation3 + $0x48] sm:$0xf]
    %v81 = vld [vmem:[#allocation3 + $0x4c] sm:$0xf]
    %v82 = vld [vmem:[#allocation3 + $0x50] sm:$0xf]
    %v83 = vld [vmem:[#allocation3 + $0x54] sm:$0xf]
    %v84 = vld [vmem:[#allocation3 + $0x58] sm:$0xf]
    %v85 = vld [vmem:[#allocation3 + $0x5c] sm:$0xf]
    %v86 = vld [vmem:[#allocation3 + $0x60] sm:$0xf]
    %v87 = vld [vmem:[#allocation3 + $0x64] sm:$0xf]
    %v88 = vld [vmem:[#allocation3 + $0x68] sm:$0xf]
    %v89 = vld [vmem:[#allocation3 + $0x6c] sm:$0xf]
    %v90 = vld [vmem:[#allocation3 + $0x70] sm:$0xf]
    %v91 = vld [vmem:[#allocation3 + $0x74] sm:$0xf]
    %v92 = vld [vmem:[#allocation3 + $0x78] sm:$0xf]
    %v93 = vld [vmem:[#allocation3 + $0x7c] sm:$0xf]
    %v94 = vld [vmem:[#allocation3 + $0x80] sm:$0xf]
    %v95 = vld [vmem:[#allocation3 + $0x84] sm:$0xf]
    %v96 = vld [vmem:[#allocation3 + $0x88] sm:$0xf]
    %v97 = vld [vmem:[#allocation3 + $0x8c] sm:$0xf]
    %v98 = vld [vmem:[#allocation3 + $0x90] sm:$0xf]
    %v99 = vld [vmem:[#allocation3 + $0x94] sm:$0xf]
    %v100 = vld [vmem:[#allocation3 + $0x98] sm:$0xf]
    %v101 = vld [vmem:[#allocation3 + $0x9c] sm:$0xf]
    %v102 = vld [vmem:[#allocation3 + $0xa0] sm:$0xf]
    %v103 = vld [vmem:[#allocation3 + $0xa4] sm:$0xf]
    %v104 = vld [vmem:[#allocation3 + $0xa8] sm:$0xf]
    %v105 = vld [vmem:[#allocation3 + $0xac] sm:$0xf]
    %v106 = vld [vmem:[#allocation3 + $0xb0] sm:$0xf]
    %v107 = vld [vmem:[#allocation3 + $0xb4] sm:$0xf]
    %v108 = vld [vmem:[#allocation3 + $0xb8] sm:$0xf]
    %v109 = vld [vmem:[#allocation3 + $0xbc] sm:$0xf]
    %v110 = vld [vmem:[#allocation3 + $0xc0] sm:$0xf]
    %v111 = vld [vmem:[#allocation3 + $0xc4] sm:$0xf]
    %v112 = vld [vmem:[#allocation3 + $0xc8] sm:$0xf]
    %v113 = vld [vmem:[#allocation3 + $0xcc] sm:$0xf]
    %v114 = vld [vmem:[#allocation3 + $0xd0] sm:$0xf]
    %v115 = vld [vmem:[#allocation3 + $0xd4] sm:$0xf]
    %v116 = vld [vmem:[#allocation3 + $0xd8] sm:$0xf]
    %v117 = vld [vmem:[#allocation3 + $0xdc] sm:$0xf]
    %v118 = vld [vmem:[#allocation3 + $0xe0] sm:$0xf]
    %v119 = vld [vmem:[#allocation3 + $0xe4] sm:$0xf]
    %v120 = vld [vmem:[#allocation3 + $0xe8] sm:$0xf]
    %v121 = vld [vmem:[#allocation3 + $0xec] sm:$0xf]
    %v122 = vld [vmem:[#allocation3 + $0xf0] sm:$0xf]
    %v123 = vld [vmem:[#allocation3 + $0xf4] sm:$0xf]
    %v124 = vld [vmem:[#allocation3 + $0xf8] sm:$0xf]
    %v125 = vld [vmem:[#allocation3 + $0xfc] sm:$0xf]
    %v126 = vld [vmem:[#allocation3 + $0x100] sm:$0xf]
    %v127 = vld [vmem:[#allocation3 + $0x104] sm:$0xf]
    %v128 = vld [vmem:[#allocation3 + $0x108] sm:$0xf]
    %v129 = vld [vmem:[#allocation3 + $0x10c] sm:$0xf]
    %v130 = vld [vmem:[#allocation3 + $0x110] sm:$0xf]
    %v131 = vld [vmem:[#allocation3 + $0x114] sm:$0xf]
    %v132 = vld [vmem:[#allocation3 + $0x118] sm:$0xf]
    %v133 = vld [vmem:[#allocation3 + $0x11c] sm:$0xf]
    %v134 = vld [vmem:[#allocation3 + $0x120] sm:$0xf]
    %v135 = vld [vmem:[#allocation3 + $0x124] sm:$0xf]
    %v136 = vld [vmem:[#allocation3 + $0x128] sm:$0xf]
    %v137 = vld [vmem:[#allocation3 + $0x12c] sm:$0xf]
    %v138 = vld [vmem:[#allocation3 + $0x130] sm:$0xf]
    %v139 = vld [vmem:[#allocation3 + $0x134] sm:$0xf]
    %v140 = vld [vmem:[#allocation3 + $0x138] sm:$0xf]
    %v141 = vld [vmem:[#allocation3 + $0x13c] sm:$0xf]
    %v142 = vld [vmem:[#allocation3 + $0x140] sm:$0xf]
    %v143 = vld [vmem:[#allocation3 + $0x144] sm:$0xf]
    %v144 = vld [vmem:[#allocation3 + $0x148] sm:$0xf]
    %v145 = vld [vmem:[#allocation3 + $0x14c] sm:$0xf]
    %v146 = vld [vmem:[#allocation3 + $0x150] sm:$0xf]
    %v147 = vld [vmem:[#allocation3 + $0x154] sm:$0xf]
    %v148 = vld [vmem:[#allocation3 + $0x158] sm:$0xf]
    %v149 = vld [vmem:[#allocation3 + $0x15c] sm:$0xf]
    %v150 = vld [vmem:[#allocation3 + $0x160] sm:$0xf]
    %v151 = vld [vmem:[#allocation3 + $0x164] sm:$0xf]
    %v152 = vld [vmem:[#allocation3 + $0x168] sm:$0xf]
    %v153 = vld [vmem:[#allocation3 + $0x16c] sm:$0xf]
    %v154 = vld [vmem:[#allocation3 + $0x170] sm:$0xf]
    %v155 = vld [vmem:[#allocation3 + $0x174] sm:$0xf]
    %v156 = vld [vmem:[#allocation3 + $0x178] sm:$0xf]
    %v157 = vld [vmem:[#allocation3 + $0x17c] sm:$0xf]
    %v158 = vld [vmem:[#allocation3 + $0x180] sm:$0xf]
    %v159 = vld [vmem:[#allocation3 + $0x184] sm:$0xf]
    %v160 = vld [vmem:[#allocation3 + $0x188] sm:$0xf]
    %v161 = vld [vmem:[#allocation3 + $0x18c] sm:$0xf]
    %v162 = vld [vmem:[#allocation3 + $0x190] sm:$0xf]
    %v163 = vld [vmem:[#allocation3 + $0x194] sm:$0xf]
    %v164 = vld [vmem:[#allocation3 + $0x198] sm:$0xf]
    %v165 = vld [vmem:[#allocation3 + $0x19c] sm:$0xf]
    %v166 = vld [vmem:[#allocation3 + $0x1a0] sm:$0xf]
    %v167 = vld [vmem:[#allocation3 + $0x1a4] sm:$0xf]
    %v168 = vld [vmem:[#allocation3 + $0x1a8] sm:$0xf]
    %v169 = vld [vmem:[#allocation3 + $0x1ac] sm:$0xf]
    %v170 = vld [vmem:[#allocation3 + $0x1b0] sm:$0xf]
    %v171 = vld [vmem:[#allocation3 + $0x1b4] sm:$0xf]
    %v172 = vld [vmem:[#allocation3 + $0x1b8] sm:$0xf]
    %v173 = vld [vmem:[#allocation3 + $0x1bc] sm:$0xf]
    %v174 = vld [vmem:[#allocation3 + $0x1c0] sm:$0xf]
    %v175 = vld [vmem:[#allocation3 + $0x1c4] sm:$0xf]
    %v176 = vld [vmem:[#allocation3 + $0x1c8] sm:$0xf]
    %v177 = vld [vmem:[#allocation3 + $0x1cc] sm:$0xf]
    %v178 = vld [vmem:[#allocation3 + $0x1d0] sm:$0xf]
    %v179 = vld [vmem:[#allocation3 + $0x1d4] sm:$0xf]
    %v180 = vld [vmem:[#allocation3 + $0x1d8] sm:$0xf]
    %v181 = vld [vmem:[#allocation3 + $0x1dc] sm:$0xf]
    %v182 = vld [vmem:[#allocation3 + $0x1e0] sm:$0xf]
    %v183 = vld [vmem:[#allocation3 + $0x1e4] sm:$0xf]
    %v184 = vld [vmem:[#allocation3 + $0x1e8] sm:$0xf]
    %v185 = vld [vmem:[#allocation3 + $0x1ec] sm:$0xf]
    %v186 = vld [vmem:[#allocation3 + $0x1f0] sm:$0xf]
    %v187 = vld [vmem:[#allocation3 + $0x1f4] sm:$0xf]
    %v188 = vld [vmem:[#allocation3 + $0x1f8] sm:$0xf]
    %v189 = vld [vmem:[#allocation3 + $0x1fc] sm:$0xf]
    %v194 = vunpack.c.l.b16 %v58
    %v195 = vunpack.c.h.b16 %v58
    %v196 = vunpack.c.l.b16 %v59
    %v197 = vunpack.c.h.b16 %v59
    %v198 = vunpack.c.l.b16 %v60
    %v199 = vunpack.c.h.b16 %v60
    %v200 = vunpack.c.l.b16 %v61
    %v201 = vunpack.c.h.b16 %v61
    %v202 = vpack.c.b16 %v194, %v194
    %v203 = vpack.c.b16 %v195, %v195
    %v204 = vpack.c.b16 %v196, %v196
    %v205 = vpack.c.b16 %v197, %v197
    %v206 = vpack.c.b16 %v198, %v198
    %v207 = vpack.c.b16 %v199, %v199
    %v208 = vpack.c.b16 %v200, %v200
    %v209 = vpack.c.b16 %v201, %v201
    %v346 = vunpack.c.l.b16 %v62
    %v347 = vunpack.c.l.b16 %v63
    %v348 = vunpack.c.l.b16 %v64
    %v349 = vunpack.c.l.b16 %v65
    %v350 = vunpack.c.l.b16 %v66
    %v351 = vunpack.c.l.b16 %v67
    %v352 = vunpack.c.l.b16 %v68
    %v353 = vunpack.c.l.b16 %v69
    %v354 = vunpack.c.l.b16 %v70
    %v355 = vunpack.c.l.b16 %v71
    %v356 = vunpack.c.l.b16 %v72
    %v357 = vunpack.c.l.b16 %v73
    %v358 = vunpack.c.l.b16 %v74
    %v359 = vunpack.c.l.b16 %v75
    %v360 = vunpack.c.l.b16 %v76
    %v361 = vunpack.c.l.b16 %v77
    %v362 = vunpack.c.l.b16 %v78
    %v363 = vunpack.c.l.b16 %v79
    %v364 = vunpack.c.l.b16 %v80
    %v365 = vunpack.c.l.b16 %v81
    %v366 = vunpack.c.l.b16 %v82
    %v367 = vunpack.c.l.b16 %v83
    %v368 = vunpack.c.l.b16 %v84
    %v369 = vunpack.c.l.b16 %v85
    %v370 = vunpack.c.l.b16 %v86
    %v371 = vunpack.c.l.b16 %v87
    %v372 = vunpack.c.l.b16 %v88
    %v373 = vunpack.c.l.b16 %v89
    %v374 = vunpack.c.l.b16 %v90
    %v375 = vunpack.c.l.b16 %v91
    %v376 = vunpack.c.l.b16 %v92
    %v377 = vunpack.c.l.b16 %v93
    %v378 = vunpack.c.l.b16 %v94
    %v379 = vunpack.c.l.b16 %v95
    %v380 = vunpack.c.l.b16 %v96
    %v381 = vunpack.c.l.b16 %v97
    %v382 = vunpack.c.l.b16 %v98
    %v383 = vunpack.c.l.b16 %v99
    %v384 = vunpack.c.l.b16 %v100
    %v385 = vunpack.c.l.b16 %v101
    %v386 = vunpack.c.l.b16 %v102
    %v387 = vunpack.c.l.b16 %v103
    %v388 = vunpack.c.l.b16 %v104
    %v389 = vunpack.c.l.b16 %v105
    %v390 = vunpack.c.l.b16 %v106
    %v391 = vunpack.c.l.b16 %v107
    %v392 = vunpack.c.l.b16 %v108
    %v393 = vunpack.c.l.b16 %v109
    %v394 = vunpack.c.l.b16 %v110
    %v395 = vunpack.c.l.b16 %v111
    %v396 = vunpack.c.l.b16 %v112
    %v397 = vunpack.c.l.b16 %v113
    %v398 = vunpack.c.l.b16 %v114
    %v399 = vunpack.c.l.b16 %v115
    %v400 = vunpack.c.l.b16 %v116
    %v401 = vunpack.c.l.b16 %v117
    %v402 = vunpack.c.l.b16 %v118
    %v403 = vunpack.c.l.b16 %v119
    %v404 = vunpack.c.l.b16 %v120
    %v405 = vunpack.c.l.b16 %v121
    %v406 = vunpack.c.l.b16 %v122
    %v407 = vunpack.c.l.b16 %v123
    %v408 = vunpack.c.l.b16 %v124
    %v409 = vunpack.c.l.b16 %v125
    %v410 = vunpack.c.l.b16 %v126
    %v411 = vunpack.c.l.b16 %v127
    %v412 = vunpack.c.l.b16 %v128
    %v413 = vunpack.c.l.b16 %v129
    %v414 = vunpack.c.l.b16 %v130
    %v415 = vunpack.c.l.b16 %v131
    %v416 = vunpack.c.l.b16 %v132
    %v417 = vunpack.c.l.b16 %v133
    %v418 = vunpack.c.l.b16 %v134
    %v419 = vunpack.c.l.b16 %v135
    %v420 = vunpack.c.l.b16 %v136
    %v421 = vunpack.c.l.b16 %v137
    %v422 = vunpack.c.l.b16 %v138
    %v423 = vunpack.c.l.b16 %v139
    %v424 = vunpack.c.l.b16 %v140
    %v425 = vunpack.c.l.b16 %v141
    %v426 = vunpack.c.l.b16 %v142
    %v427 = vunpack.c.l.b16 %v143
    %v428 = vunpack.c.l.b16 %v144
    %v429 = vunpack.c.l.b16 %v145
    %v430 = vunpack.c.l.b16 %v146
    %v431 = vunpack.c.l.b16 %v147
    %v432 = vunpack.c.l.b16 %v148
    %v433 = vunpack.c.l.b16 %v149
    %v434 = vunpack.c.l.b16 %v150
    %v435 = vunpack.c.l.b16 %v151
    %v436 = vunpack.c.l.b16 %v152
    %v437 = vunpack.c.l.b16 %v153
    %v438 = vunpack.c.l.b16 %v154
    %v439 = vunpack.c.l.b16 %v155
    %v440 = vunpack.c.l.b16 %v156
    %v441 = vunpack.c.l.b16 %v157
    %v442 = vunpack.c.l.b16 %v158
    %v443 = vunpack.c.l.b16 %v159
    %v444 = vunpack.c.l.b16 %v160
    %v445 = vunpack.c.l.b16 %v161
    %v446 = vunpack.c.l.b16 %v162
    %v447 = vunpack.c.l.b16 %v163
    %v448 = vunpack.c.l.b16 %v164
    %v449 = vunpack.c.l.b16 %v165
    %v450 = vunpack.c.l.b16 %v166
    %v451 = vunpack.c.l.b16 %v167
    %v452 = vunpack.c.l.b16 %v168
    %v453 = vunpack.c.l.b16 %v169
    %v454 = vunpack.c.l.b16 %v170
    %v455 = vunpack.c.l.b16 %v171
    %v456 = vunpack.c.l.b16 %v172
    %v457 = vunpack.c.l.b16 %v173
    %v458 = vunpack.c.l.b16 %v174
    %v459 = vunpack.c.l.b16 %v175
    %v460 = vunpack.c.l.b16 %v176
    %v461 = vunpack.c.l.b16 %v177
    %v462 = vunpack.c.l.b16 %v178
    %v463 = vunpack.c.l.b16 %v179
    %v464 = vunpack.c.l.b16 %v180
    %v465 = vunpack.c.l.b16 %v181
    %v466 = vunpack.c.l.b16 %v182
    %v467 = vunpack.c.l.b16 %v183
    %v468 = vunpack.c.l.b16 %v184
    %v469 = vunpack.c.l.b16 %v185
    %v470 = vunpack.c.l.b16 %v186
    %v471 = vunpack.c.l.b16 %v187
    %v472 = vunpack.c.l.b16 %v188
    %v473 = vunpack.c.l.b16 %v189
    %v474 = vpack.c.b16 %v347, %v346
    %v475 = vpack.c.b16 %v349, %v348
    %v476 = vpack.c.b16 %v351, %v350
    %v477 = vpack.c.b16 %v353, %v352
    %v478 = vpack.c.b16 %v355, %v354
    %v479 = vpack.c.b16 %v357, %v356
    %v480 = vpack.c.b16 %v359, %v358
    %v481 = vpack.c.b16 %v361, %v360
    %v482 = vpack.c.b16 %v363, %v362
    %v483 = vpack.c.b16 %v365, %v364
    %v484 = vpack.c.b16 %v367, %v366
    %v485 = vpack.c.b16 %v369, %v368
    %v486 = vpack.c.b16 %v371, %v370
    %v487 = vpack.c.b16 %v373, %v372
    %v488 = vpack.c.b16 %v375, %v374
    %v489 = vpack.c.b16 %v377, %v376
    %v490 = vpack.c.b16 %v379, %v378
    %v491 = vpack.c.b16 %v381, %v380
    %v492 = vpack.c.b16 %v383, %v382
    %v493 = vpack.c.b16 %v385, %v384
    %v494 = vpack.c.b16 %v387, %v386
    %v495 = vpack.c.b16 %v389, %v388
    %v496 = vpack.c.b16 %v391, %v390
    %v497 = vpack.c.b16 %v393, %v392
    %v498 = vpack.c.b16 %v395, %v394
    %v499 = vpack.c.b16 %v397, %v396
    %v500 = vpack.c.b16 %v399, %v398
    %v501 = vpack.c.b16 %v401, %v400
    %v502 = vpack.c.b16 %v403, %v402
    %v503 = vpack.c.b16 %v405, %v404
    %v504 = vpack.c.b16 %v407, %v406
    %v505 = vpack.c.b16 %v409, %v408
    %v506 = vpack.c.b16 %v411, %v410
    %v507 = vpack.c.b16 %v413, %v412
    %v508 = vpack.c.b16 %v415, %v414
    %v509 = vpack.c.b16 %v417, %v416
    %v510 = vpack.c.b16 %v419, %v418
    %v511 = vpack.c.b16 %v421, %v420
    %v512 = vpack.c.b16 %v423, %v422
    %v513 = vpack.c.b16 %v425, %v424
    %v514 = vpack.c.b16 %v427, %v426
    %v515 = vpack.c.b16 %v429, %v428
    %v516 = vpack.c.b16 %v431, %v430
    %v517 = vpack.c.b16 %v433, %v432
    %v518 = vpack.c.b16 %v435, %v434
    %v519 = vpack.c.b16 %v437, %v436
    %v520 = vpack.c.b16 %v439, %v438
    %v521 = vpack.c.b16 %v441, %v440
    %v522 = vpack.c.b16 %v443, %v442
    %v523 = vpack.c.b16 %v445, %v444
    %v524 = vpack.c.b16 %v447, %v446
    %v525 = vpack.c.b16 %v449, %v448
    %v526 = vpack.c.b16 %v451, %v450
    %v527 = vpack.c.b16 %v453, %v452
    %v528 = vpack.c.b16 %v455, %v454
    %v529 = vpack.c.b16 %v457, %v456
    %v530 = vpack.c.b16 %v459, %v458
    %v531 = vpack.c.b16 %v461, %v460
    %v532 = vpack.c.b16 %v463, %v462
    %v533 = vpack.c.b16 %v465, %v464
    %v534 = vpack.c.b16 %v467, %v466
    %v535 = vpack.c.b16 %v469, %v468
    %v536 = vpack.c.b16 %v471, %v470
    %v537 = vpack.c.b16 %v473, %v472
    %602 = vmatpush.bf16.msra.mxu0 %v481
    %603 = vmatpush.bf16.msra.mxu0 %v480
    %604 = vmatpush.bf16.msra.mxu0 %v479
    %605 = vmatpush.bf16.msra.mxu0 %v478
    %606 = vmatpush.bf16.msra.mxu0 %v477
    %607 = vmatpush.bf16.msra.mxu0 %v476
    %608 = vmatpush.bf16.msra.mxu0 %v475
    %609 = vmatpush.bf16.msra.mxu0 %v474
    %610 = vmatmul.bf16.gmra.mxu0 %v202
    %v611 = vpop.f32.mrf.mxu0
    %v612 = vadd.f32 0.0, %v611
    %v613 = vpop.f32.mrf.mxu0
    %614 = vdwg.mxu0
    %615 = vmatpush.bf16.msra.mxu0 %v489
    %616 = vmatpush.bf16.msra.mxu0 %v488
    %617 = vmatpush.bf16.msra.mxu0 %v487
    %618 = vmatpush.bf16.msra.mxu0 %v486
    %619 = vmatpush.bf16.msra.mxu0 %v485
    %620 = vmatpush.bf16.msra.mxu0 %v484
    %621 = vmatpush.bf16.msra.mxu0 %v483
    %622 = vmatpush.bf16.msra.mxu0 %v482
    %623 = vmatmul.bf16.gmra.mxu0 %v203
    %v624 = vpop.f32.mrf.mxu0
    %v625 = vadd.f32 %v612, %v624
    %v626 = vpop.f32.mrf.mxu0
    %627 = vdwg.mxu0
    %628 = vmatpush.bf16.msra.mxu0 %v497
    %629 = vmatpush.bf16.msra.mxu0 %v496
    %630 = vmatpush.bf16.msra.mxu0 %v495
    %631 = vmatpush.bf16.msra.mxu0 %v494
    %632 = vmatpush.bf16.msra.mxu0 %v493
    %633 = vmatpush.bf16.msra.mxu0 %v492
    %634 = vmatpush.bf16.msra.mxu0 %v491
    %635 = vmatpush.bf16.msra.mxu0 %v490
    %636 = vmatmul.bf16.gmra.mxu0 %v204
    %v637 = vpop.f32.mrf.mxu0
    %v638 = vadd.f32 %v625, %v637
    %v639 = vpop.f32.mrf.mxu0
    %640 = vdwg.mxu0
    %641 = vmatpush.bf16.msra.mxu0 %v505
    %642 = vmatpush.bf16.msra.mxu0 %v504
    %643 = vmatpush.bf16.msra.mxu0 %v503
    %644 = vmatpush.bf16.msra.mxu0 %v502
    %645 = vmatpush.bf16.msra.mxu0 %v501
    %646 = vmatpush.bf16.msra.mxu0 %v500
    %647 = vmatpush.bf16.msra.mxu0 %v499
    %648 = vmatpush.bf16.msra.mxu0 %v498
    %649 = vmatmul.bf16.gmra.mxu0 %v205
    %v650 = vpop.f32.mrf.mxu0
    %v651 = vadd.f32 %v638, %v650
    %v652 = vpop.f32.mrf.mxu0
    %653 = vdwg.mxu0
    %654 = vmatpush.bf16.msra.mxu0 %v513
    %655 = vmatpush.bf16.msra.mxu0 %v512
    %656 = vmatpush.bf16.msra.mxu0 %v511
    %657 = vmatpush.bf16.msra.mxu0 %v510
    %658 = vmatpush.bf16.msra.mxu0 %v509
    %659 = vmatpush.bf16.msra.mxu0 %v508
    %660 = vmatpush.bf16.msra.mxu0 %v507
    %661 = vmatpush.bf16.msra.mxu0 %v506
    %662 = vmatmul.bf16.gmra.mxu0 %v206
    %v663 = vpop.f32.mrf.mxu0
    %v664 = vadd.f32 %v651, %v663
    %v665 = vpop.f32.mrf.mxu0
    %666 = vdwg.mxu0
    %667 = vmatpush.bf16.msra.mxu0 %v521
    %668 = vmatpush.bf16.msra.mxu0 %v520
    %669 = vmatpush.bf16.msra.mxu0 %v519
    %670 = vmatpush.bf16.msra.mxu0 %v518
    %671 = vmatpush.bf16.msra.mxu0 %v517
    %672 = vmatpush.bf16.msra.mxu0 %v516
    %673 = vmatpush.bf16.msra.mxu0 %v515
    %674 = vmatpush.bf16.msra.mxu0 %v514
    %675 = vmatmul.bf16.gmra.mxu0 %v207
    %v676 = vpop.f32.mrf.mxu0
    %v677 = vadd.f32 %v664, %v676
    %v678 = vpop.f32.mrf.mxu0
    %679 = vdwg.mxu0
    %680 = vmatpush.bf16.msra.mxu0 %v529
    %681 = vmatpush.bf16.msra.mxu0 %v528
    %682 = vmatpush.bf16.msra.mxu0 %v527
    %683 = vmatpush.bf16.msra.mxu0 %v526
    %684 = vmatpush.bf16.msra.mxu0 %v525
    %685 = vmatpush.bf16.msra.mxu0 %v524
    %686 = vmatpush.bf16.msra.mxu0 %v523
    %687 = vmatpush.bf16.msra.mxu0 %v522
    %688 = vmatmul.bf16.gmra.mxu0 %v208
    %v689 = vpop.f32.mrf.mxu0
    %v690 = vadd.f32 %v677, %v689
    %v691 = vpop.f32.mrf.mxu0
    %692 = vdwg.mxu0
    %693 = vmatpush.bf16.msra.mxu0 %v537
    %694 = vmatpush.bf16.msra.mxu0 %v536
    %695 = vmatpush.bf16.msra.mxu0 %v535
    %696 = vmatpush.bf16.msra.mxu0 %v534
    %697 = vmatpush.bf16.msra.mxu0 %v533
    %698 = vmatpush.bf16.msra.mxu0 %v532
    %699 = vmatpush.bf16.msra.mxu0 %v531
    %700 = vmatpush.bf16.msra.mxu0 %v530
    %701 = vmatmul.bf16.gmra.mxu0 %v209
    %v702 = vpop.f32.mrf.mxu0
    %v703 = vadd.f32 %v690, %v702
    %v704 = vpop.f32.mrf.mxu0
    %705 = vdwg.mxu0
    %v706 = vadd.f32 %v57, %v703
    %707 = vst [vmem:[#allocation2] sm:$0xff] %v706
    // Predicated region
    $region46: #{wrapper_forward.1} parent=1 // pred_check
      %p708 = pneg %p52
    $region47: #{wrapper_forward.1} parent=1 // pred_check_branch
      %710 = sbr.rel (%p708) target = $region49
    $region48: #{wrapper_forward.1} parent=1 // pred_region
      %v711 = vld [vmem:[#allocation2] sm:$0xff]
      %v712 = vld [vmem:[%s2] sm:$0x1]
      %v714 = vperm.slane %v712, 0
      %v716 = vadd.f32 %v711, %v714
      %v717 = vmax.f32 %v716, 0.0
      %718 = vst [vmem:[%s9] sm:$0xff] %v717
      %v719 = vpack.c.bf16 %v717, %v717
      %v720 = vld [vmem:[%s3] sm:$0xff]
      %v721 = vld [vmem:[%s3 + $0x8] sm:$0xff]
      %v722 = vld [vmem:[%s3 + $0x10] sm:$0xff]
      %v723 = vld [vmem:[%s3 + $0x18] sm:$0xff]
      %v724 = vld [vmem:[%s3 + $0x20] sm:$0xff]
      %v725 = vld [vmem:[%s3 + $0x28] sm:$0xff]
      %v726 = vld [vmem:[%s3 + $0x30] sm:$0xff]
      %v727 = vld [vmem:[%s3 + $0x38] sm:$0xff]
      %v728 = vld [vmem:[%s3 + $0x40] sm:$0xff]
      %v729 = vld [vmem:[%s3 + $0x48] sm:$0xff]
      %v730 = vld [vmem:[%s3 + $0x50] sm:$0xff]
      %v731 = vld [vmem:[%s3 + $0x58] sm:$0xff]
      %v732 = vld [vmem:[%s3 + $0x60] sm:$0xff]
      %v733 = vld [vmem:[%s3 + $0x68] sm:$0xff]
      %v734 = vld [vmem:[%s3 + $0x70] sm:$0xff]
      %v735 = vld [vmem:[%s3 + $0x78] sm:$0xff]
      %v736 = vld [vmem:[%s4] sm:$0x3]
      %v738 = vperm.slane %v736, 0
      %v739 = vperm.slane %v736, 1
      %v758 = vunpack.c.l.b16 %v720
      %v759 = vunpack.c.h.b16 %v720
      %v760 = vunpack.c.l.b16 %v721
      %v761 = vunpack.c.h.b16 %v721
      %v762 = vunpack.c.l.b16 %v722
      %v763 = vunpack.c.h.b16 %v722
      %v764 = vunpack.c.l.b16 %v723
      %v765 = vunpack.c.h.b16 %v723
      %v766 = vunpack.c.l.b16 %v724
      %v767 = vunpack.c.h.b16 %v724
      %v768 = vunpack.c.l.b16 %v725
      %v769 = vunpack.c.h.b16 %v725
      %v770 = vunpack.c.l.b16 %v726
      %v771 = vunpack.c.h.b16 %v726
      %v772 = vunpack.c.l.b16 %v727
      %v773 = vunpack.c.h.b16 %v727
      %v774 = vunpack.c.l.b16 %v728
      %v775 = vunpack.c.h.b16 %v728
      %v776 = vunpack.c.l.b16 %v729
      %v777 = vunpack.c.h.b16 %v729
      %v778 = vunpack.c.l.b16 %v730
      %v779 = vunpack.c.h.b16 %v730
      %v780 = vunpack.c.l.b16 %v731
      %v781 = vunpack.c.h.b16 %v731
      %v782 = vunpack.c.l.b16 %v732
      %v783 = vunpack.c.h.b16 %v732
      %v784 = vunpack.c.l.b16 %v733
      %v785 = vunpack.c.h.b16 %v733
      %v786 = vunpack.c.l.b16 %v734
      %v787 = vunpack.c.h.b16 %v734
      %v788 = vunpack.c.l.b16 %v735
      %v789 = vunpack.c.h.b16 %v735
      %v790 = vpack.c.b16 %v760, %v758
      %v791 = vpack.c.b16 %v761, %v759
      %v792 = vpack.c.b16 %v764, %v762
      %v793 = vpack.c.b16 %v765, %v763
      %v794 = vpack.c.b16 %v768, %v766
      %v795 = vpack.c.b16 %v769, %v767
      %v796 = vpack.c.b16 %v772, %v770
      %v797 = vpack.c.b16 %v773, %v771
      %v798 = vpack.c.b16 %v776, %v774
      %v799 = vpack.c.b16 %v777, %v775
      %v800 = vpack.c.b16 %v780, %v778
      %v801 = vpack.c.b16 %v781, %v779
      %v802 = vpack.c.b16 %v784, %v782
      %v803 = vpack.c.b16 %v785, %v783
      %v804 = vpack.c.b16 %v788, %v786
      %v805 = vpack.c.b16 %v789, %v787
      %822 = vmatpush.bf16.msra.mxu0 %v804
      %823 = vmatpush.bf16.msra.mxu0 %v802
      %824 = vmatpush.bf16.msra.mxu0 %v800
      %825 = vmatpush.bf16.msra.mxu0 %v798
      %826 = vmatpush.bf16.msra.mxu0 %v796
      %827 = vmatpush.bf16.msra.mxu0 %v794
      %828 = vmatpush.bf16.msra.mxu0 %v792
      %829 = vmatpush.bf16.msra.mxu0 %v790
      %830 = vmatmul.bf16.gmra.mxu0 %v719
      %v831 = vpop.f32.mrf.mxu0
      %v832 = vadd.f32 %v738, %v831
      %v833 = vpop.f32.mrf.mxu0
      %834 = vdwg.mxu0
      %835 = vmatpush.bf16.msra.mxu0 %v805
      %836 = vmatpush.bf16.msra.mxu0 %v803
      %837 = vmatpush.bf16.msra.mxu0 %v801
      %838 = vmatpush.bf16.msra.mxu0 %v799
      %839 = vmatpush.bf16.msra.mxu0 %v797
      %840 = vmatpush.bf16.msra.mxu0 %v795
      %841 = vmatpush.bf16.msra.mxu0 %v793
      %842 = vmatpush.bf16.msra.mxu0 %v791
      %843 = vmatmul.bf16.gmra.mxu0 %v719
      %v844 = vpop.f32.mrf.mxu0
      %v845 = vadd.f32 %v739, %v844
      %v846 = vpop.f32.mrf.mxu0
      %847 = vdwg.mxu0
      %848 = vst [vmem:[%s10] sm:$0xff] %v832
      %v849 = vmax.f32 %v845, 0.0
      %v850 = vpack.c.bf16 %v849, %v849
      %v851 = vld [vmem:[%s5] sm:$0xf]
      %v852 = vld [vmem:[%s5 + $0x4] sm:$0xf]
      %v853 = vld [vmem:[%s5 + $0x8] sm:$0xf]
      %v854 = vld [vmem:[%s5 + $0xc] sm:$0xf]
      %v855 = vld [vmem:[%s5 + $0x10] sm:$0xf]
      %v856 = vld [vmem:[%s5 + $0x14] sm:$0xf]
      %v857 = vld [vmem:[%s5 + $0x18] sm:$0xf]
      %v858 = vld [vmem:[%s5 + $0x1c] sm:$0xf]
      %v859 = vld [vmem:[%s5 + $0x20] sm:$0xf]
      %v860 = vld [vmem:[%s5 + $0x24] sm:$0xf]
      %v861 = vld [vmem:[%s5 + $0x28] sm:$0xf]
      %v862 = vld [vmem:[%s5 + $0x2c] sm:$0xf]
      %v863 = vld [vmem:[%s5 + $0x30] sm:$0xf]
      %v864 = vld [vmem:[%s5 + $0x34] sm:$0xf]
      %v865 = vld [vmem:[%s5 + $0x38] sm:$0xf]
      %v866 = vld [vmem:[%s5 + $0x3c] sm:$0xf]
      %v867 = vld [vmem:[%s6] sm:$0x1]
      %v869 = vperm.slane %v867, 0
      %v887 = vunpack.c.l.b16 %v851
      %v888 = vunpack.c.l.b16 %v852
      %v889 = vunpack.c.l.b16 %v853
      %v890 = vunpack.c.l.b16 %v854
      %v891 = vunpack.c.l.b16 %v855
      %v892 = vunpack.c.l.b16 %v856
      %v893 = vunpack.c.l.b16 %v857
      %v894 = vunpack.c.l.b16 %v858
      %v895 = vunpack.c.l.b16 %v859
      %v896 = vunpack.c.l.b16 %v860
      %v897 = vunpack.c.l.b16 %v861
      %v898 = vunpack.c.l.b16 %v862
      %v899 = vunpack.c.l.b16 %v863
      %v900 = vunpack.c.l.b16 %v864
      %v901 = vunpack.c.l.b16 %v865
      %v902 = vunpack.c.l.b16 %v866
      %v903 = vpack.c.b16 %v888, %v887
      %v904 = vpack.c.b16 %v890, %v889
      %v905 = vpack.c.b16 %v892, %v891
      %v906 = vpack.c.b16 %v894, %v893
      %v907 = vpack.c.b16 %v896, %v895
      %v908 = vpack.c.b16 %v898, %v897
      %v909 = vpack.c.b16 %v900, %v899
      %v910 = vpack.c.b16 %v902, %v901
      %919 = vmatpush.bf16.msra.mxu0 %v910
      %920 = vmatpush.bf16.msra.mxu0 %v909
      %921 = vmatpush.bf16.msra.mxu0 %v908
      %922 = vmatpush.bf16.msra.mxu0 %v907
      %923 = vmatpush.bf16.msra.mxu0 %v906
      %924 = vmatpush.bf16.msra.mxu0 %v905
      %925 = vmatpush.bf16.msra.mxu0 %v904
      %926 = vmatpush.bf16.msra.mxu0 %v903
      %927 = vmatmul.bf16.gmra.mxu0 %v850
      %v928 = vpop.f32.mrf.mxu0
      %v929 = vadd.f32 %v869, %v928
      %v930 = vpop.f32.mrf.mxu0
      %931 = vdwg.mxu0
      %v932 = vmul.f32 %v929, %v929
      %933 = vadd.xlane.f32.xlu0 %v932
      %v934 = vpop.xlane.xlu0 %933
      %v935 = vrsqrt.pop %v934
      %v936 = vmul.f32 %v935, %v934
      %v937 = vmul.f32 %v936, %v935
      %v938 = vmul.f32 0.5, %v937
      %v939 = vsub.f32 1.5, %v938
      %v940 = vmul.f32 %v935, %v939
      %vm941 = vweird.f32 %v934
      %vm942 = vweird.f32 %v935
      %vm943 = vmor %vm941, %vm942
      %v944 = vsel %vm943, %v935, %v940
      %v945 = vmul.f32 %v944, 16.0
      %v946 = vmul.f32 %v929, %v945
      %947 = vst [vmem:[%s11] sm:$0xff] %v946
      %v948 = vpack.c.bf16 %v946, %v946
      %v949 = vld [vmem:[%s7] sm:$0xf]
      %v950 = vld [vmem:[%s7 + $0x4] sm:$0xf]
      %v951 = vld [vmem:[%s7 + $0x8] sm:$0xf]
      %v952 = vld [vmem:[%s7 + $0xc] sm:$0xf]
      %v953 = vld [vmem:[%s7 + $0x10] sm:$0xf]
      %v954 = vld [vmem:[%s7 + $0x14] sm:$0xf]
      %v955 = vld [vmem:[%s7 + $0x18] sm:$0xf]
      %v956 = vld [vmem:[%s7 + $0x1c] sm:$0xf]
      %v957 = vld [vmem:[%s7 + $0x20] sm:$0xf]
      %v958 = vld [vmem:[%s7 + $0x24] sm:$0xf]
      %v959 = vld [vmem:[%s7 + $0x28] sm:$0xf]
      %v960 = vld [vmem:[%s7 + $0x2c] sm:$0xf]
      %v961 = vld [vmem:[%s7 + $0x30] sm:$0xf]
      %v962 = vld [vmem:[%s7 + $0x34] sm:$0xf]
      %v963 = vld [vmem:[%s7 + $0x38] sm:$0xf]
      %v964 = vld [vmem:[%s7 + $0x3c] sm:$0xf]
      %v965 = vld [vmem:[%s8] sm:$0x1]
      %v967 = vperm.slane %v965, 0
      %v985 = vunpack.c.l.b16 %v949
      %v986 = vunpack.c.l.b16 %v950
      %v987 = vunpack.c.l.b16 %v951
      %v988 = vunpack.c.l.b16 %v952
      %v989 = vunpack.c.l.b16 %v953
      %v990 = vunpack.c.l.b16 %v954
      %v991 = vunpack.c.l.b16 %v955
      %v992 = vunpack.c.l.b16 %v956
      %v993 = vunpack.c.l.b16 %v957
      %v994 = vunpack.c.l.b16 %v958
      %v995 = vunpack.c.l.b16 %v959
      %v996 = vunpack.c.l.b16 %v960
      %v997 = vunpack.c.l.b16 %v961
      %v998 = vunpack.c.l.b16 %v962
      %v999 = vunpack.c.l.b16 %v963
      %v1000 = vunpack.c.l.b16 %v964
      %v1001 = vpack.c.b16 %v986, %v985
      %v1002 = vpack.c.b16 %v988, %v987
      %v1003 = vpack.c.b16 %v990, %v989
      %v1004 = vpack.c.b16 %v992, %v991
      %v1005 = vpack.c.b16 %v994, %v993
      %v1006 = vpack.c.b16 %v996, %v995
      %v1007 = vpack.c.b16 %v998, %v997
      %v1008 = vpack.c.b16 %v1000, %v999
      %1017 = vmatpush.bf16.msra.mxu0 %v1008
      %1018 = vmatpush.bf16.msra.mxu0 %v1007
      %1019 = vmatpush.bf16.msra.mxu0 %v1006
      %1020 = vmatpush.bf16.msra.mxu0 %v1005
      %1021 = vmatpush.bf16.msra.mxu0 %v1004
      %1022 = vmatpush.bf16.msra.mxu0 %v1003
      %1023 = vmatpush.bf16.msra.mxu0 %v1002
      %1024 = vmatpush.bf16.msra.mxu0 %v1001
      %1025 = vmatmul.bf16.gmra.mxu0 %v948
      %v1026 = vpop.f32.mrf.mxu0
      %v1027 = vadd.f32 %v967, %v1026
      %v1028 = vpop.f32.mrf.mxu0
      %1029 = vdwg.mxu0
      %1030 = vst [vmem:[%s12] sm:$0xff] %v1027
    $region49: #{wrapper_forward.1} parent=1 // pred_fallthru
      _
    // Predicated region
    $region50: #{wrapper_forward.1} parent=1 // pred_check
      _
    $region51: #{wrapper_forward.1} parent=1 // pred_check_branch
      %1032 = sbr.rel (0) target = $region53
    $region52: #{wrapper_forward.1} parent=1 // pred_region
      _
    $region53: #{wrapper_forward.1} parent=1 // pred_fallthru
      _
    // Predicated region
    $region54: #{wrapper_forward.1} parent=1 // pred_check
      _
    $region55: #{wrapper_forward.1} parent=1 // pred_check_branch
      %1034 = sbr.rel (0) target = $region57
    $region56: #{wrapper_forward.1} parent=1 // pred_region
      _
    $region57: #{wrapper_forward.1} parent=1 // pred_fallthru
      _
    // Predicated region
    $region58: #{wrapper_forward.1} parent=1 // pred_check
      _
    $region59: #{wrapper_forward.1} parent=1 // pred_check_branch
      %1036 = sbr.rel (0) target = $region61
    $region60: #{wrapper_forward.1} parent=1 // pred_region
      _
    $region61: #{wrapper_forward.1} parent=1 // pred_fallthru
      _
    // Predicated region
    $region62: #{wrapper_forward.1} parent=1 // pred_check
      _
    $region63: #{wrapper_forward.1} parent=1 // pred_check_branch
      %1038 = sbr.rel (0) target = $region65
    $region64: #{wrapper_forward.1} parent=1 // pred_region
      _
    $region65: #{wrapper_forward.1} parent=1 // pred_fallthru
      _
    // Predicated region
    $region66: #{wrapper_forward.1} parent=1 // pred_check
      _
    $region67: #{wrapper_forward.1} parent=1 // pred_check_branch
      %1040 = sbr.rel (0) target = $region69
    $region68: #{wrapper_forward.1} parent=1 // pred_region
      _
    $region69: #{wrapper_forward.1} parent=1 // pred_fallthru
      _
    // Predicated region
    $region70: #{wrapper_forward.1} parent=1 // pred_check
      _
    $region71: #{wrapper_forward.1} parent=1 // pred_check_branch
      %1042 = sbr.rel (0) target = $region73
    $region72: #{wrapper_forward.1} parent=1 // pred_region
      _
    $region73: #{wrapper_forward.1} parent=1 // pred_fallthru
      _
    // Predicated region
    $region74: #{wrapper_forward.1} parent=1 // pred_check
      _
    $region75: #{wrapper_forward.1} parent=1 // pred_check_branch
      %1044 = sbr.rel (0) target = $region77
    $region76: #{wrapper_forward.1} parent=1 // pred_region
      _
    $region77: #{wrapper_forward.1} parent=1 // pred_fallthru
      _
    // Predicated region
    $region78: #{wrapper_forward.1} parent=1 // pred_check
      _
    $region79: #{wrapper_forward.1} parent=1 // pred_check_branch
      %1046 = sbr.rel (0) target = $region81
    $region80: #{wrapper_forward.1} parent=1 // pred_region
      _
    $region81: #{wrapper_forward.1} parent=1 // pred_fallthru
      _
    %1047 = vsyncpa [#allocation4], 1

</llo_original>
